<compile_context>
chip_gen: v5e
topology: v5e:2x2
jax: 0.10.0
libtpu: 0.0.40
codegen_flags: <defaults>
</compile_context>

<pallas_src>
import functools
import jax
import jax.numpy as jnp
from jax.experimental import pallas as pl
from jax.experimental.pallas import tpu as pltpu


VMEM_LIMIT_BYTES = 32 * 1024 * 1024  # explicit scoped-VMEM budget (safe on v5e/v6e/v7x)


def _compiler_params(sem):
    return pltpu.CompilerParams(dimension_semantics=sem,
                                vmem_limit_bytes=VMEM_LIMIT_BYTES)


def _layernorm(x, g, b, eps):
    x = x.astype(jnp.float32)
    mean = jnp.mean(x, axis=-1, keepdims=True)
    var = jnp.mean(jnp.square(x - mean), axis=-1, keepdims=True)
    return (x - mean) * jax.lax.rsqrt(var + eps) * g + b


# --------------------------- patch embedding kernel -------------------------

def _patch_embed_kernel(p_ref, w_ref, b_ref, pos_ref, o_ref):
    # p_ref: (1, Np, K) bf16   w_ref: (K, D) bf16   b_ref: (1, D)   pos_ref: (Np, D)
    x = jnp.dot(p_ref[0], w_ref[...], preferred_element_type=jnp.float32)
    o_ref[0] = x + b_ref[...] + pos_ref[...]


def patch_embed(patches, w, b, pos):
    B, N, K = patches.shape
    D = w.shape[1]
    return pl.pallas_call(
        _patch_embed_kernel,
        out_shape=jax.ShapeDtypeStruct((B, N, D), jnp.float32),
        grid=(B,),
        in_specs=[
            pl.BlockSpec((1, N, K), lambda bb: (bb, 0, 0)),
            pl.BlockSpec((K, D), lambda bb: (0, 0)),
            pl.BlockSpec((1, D), lambda bb: (0, 0)),
            pl.BlockSpec((N, D), lambda bb: (0, 0)),
        ],
        out_specs=pl.BlockSpec((1, N, D), lambda bb: (bb, 0, 0)),
        compiler_params=_compiler_params(("parallel",)),
    )(patches, w, b, pos)


# ------------------------------ QKV projection ------------------------------

def _qkv_kernel(x_ref, g_ref, b_ref, wq_ref, bq_ref, wk_ref, bk_ref,
                wv_ref, bv_ref, q_ref, k_ref, v_ref, *, eps, scale):
    # x_ref: (1, tn, D) fp32, per-head weights (1, D, hd) bf16, biases (1, 1, hd)
    hn = _layernorm(x_ref[0], g_ref[...], b_ref[...], eps).astype(jnp.bfloat16)
    q = jnp.dot(hn, wq_ref[0], preferred_element_type=jnp.float32) + bq_ref[0]
    q_ref[0, 0] = (q * scale).astype(q_ref.dtype)      # fold 1/sqrt(hd) into q
    k = jnp.dot(hn, wk_ref[0], preferred_element_type=jnp.float32) + bk_ref[0]
    k_ref[0, 0] = k.astype(k_ref.dtype)
    v = jnp.dot(hn, wv_ref[0], preferred_element_type=jnp.float32) + bv_ref[0]
    v_ref[0, 0] = v.astype(v_ref.dtype)


def qkv_project(x, lp, eps, *, row_tile):
    B, N, D = x.shape
    H, _, hd = lp["wq"].shape
    nt = N // row_tile
    scale = hd ** -0.5
    kernel = functools.partial(_qkv_kernel, eps=eps, scale=scale)
    out_sd = jax.ShapeDtypeStruct((B, H, N, hd), jnp.float32)
    w_spec = pl.BlockSpec((1, D, hd), lambda bb, i, h: (h, 0, 0))
    bias_spec = pl.BlockSpec((1, 1, hd), lambda bb, i, h: (h, 0, 0))
    out_spec = pl.BlockSpec((1, 1, row_tile, hd), lambda bb, i, h: (bb, h, i, 0))
    return pl.pallas_call(
        kernel,
        out_shape=(out_sd, out_sd, out_sd),
        grid=(B, nt, H),
        in_specs=[
            # x block index is constant along the (minor) head axis, so the
            # activation tile is DMA'd once per (batch, row-tile), not per head.
            pl.BlockSpec((1, row_tile, D), lambda bb, i, h: (bb, i, 0)),
            pl.BlockSpec((1, D), lambda bb, i, h: (0, 0)),
            pl.BlockSpec((1, D), lambda bb, i, h: (0, 0)),
            w_spec, bias_spec, w_spec, bias_spec, w_spec, bias_spec,
        ],
        out_specs=(out_spec, out_spec, out_spec),
        compiler_params=_compiler_params(("parallel", "parallel", "arbitrary")),
    )(x, lp["ln1_g"], lp["ln1_b"], lp["wq"], lp["bq"], lp["wk"], lp["bk"],
      lp["wv"], lp["bv"])


# ------------------- flash-style attention + out-proj + residual ------------

def _attn_kernel(q_ref, k_ref, v_ref, wo_ref, bo_ref, x_ref, o_ref,
                 m_sc, l_sc, acc_sc, out_sc):
    h_idx = pl.program_id(2)
    kv = pl.program_id(3)
    n_heads = pl.num_programs(2)
    n_kv = pl.num_programs(3)

    @pl.when((h_idx == 0) & (kv == 0))
    def _():                                   # fresh (batch, q-tile) block
        out_sc[...] = jnp.zeros_like(out_sc)

    @pl.when(kv == 0)
    def _():                                   # fresh head
        m_sc[...] = jnp.full_like(m_sc, -jnp.inf)
        l_sc[...] = jnp.zeros_like(l_sc)
        acc_sc[...] = jnp.zeros_like(acc_sc)

    q = q_ref[0, 0].astype(jnp.bfloat16)       # (tq, hd), already scaled
    k = k_ref[0, 0].astype(jnp.bfloat16)       # (tk, hd)
    v = v_ref[0, 0].astype(jnp.bfloat16)       # (tk, hd)

    # scores = q @ k^T (contract last dims; no explicit transpose)
    s = jax.lax.dot_general(q, k, (((1,), (1,)), ((), ())),
                            preferred_element_type=jnp.float32)   # (tq, tk)
    m_new = jnp.maximum(m_sc[...], jnp.max(s, axis=-1, keepdims=True))
    alpha = jnp.exp(m_sc[...] - m_new)
    p = jnp.exp(s - m_new)
    l_sc[...] = alpha * l_sc[...] + jnp.sum(p, axis=-1, keepdims=True)
    acc_sc[...] = alpha * acc_sc[...] + jnp.dot(
        p.astype(jnp.bfloat16), v, preferred_element_type=jnp.float32)
    m_sc[...] = m_new

    # Last kv tile of this head: normalize and fold this head's slice of the
    # output projection into the shared lane-dense (tq, D) accumulator.
    @pl.when(kv == n_kv - 1)
    def _():
        attn_h = acc_sc[...] * pl.reciprocal(l_sc[...], approx=True)
        out_sc[...] += jnp.dot(attn_h.astype(jnp.bfloat16), wo_ref[0],
                               preferred_element_type=jnp.float32)

    # Last head, last kv tile: residual add + bias, single lane-dense store.
    @pl.when((h_idx == n_heads - 1) & (kv == n_kv - 1))
    def _():
        o_ref[0] = x_ref[0] + out_sc[...] + bo_ref[...]


def attention_block(q, k, v, x, lp, *, q_tile, kv_tile):
    B, H, N, hd = q.shape
    D = x.shape[2]
    nq = N // q_tile
    nkv = N // kv_tile
    return pl.pallas_call(
        _attn_kernel,
        out_shape=jax.ShapeDtypeStruct((B, N, D), jnp.float32),
        grid=(B, nq, H, nkv),
        in_specs=[
            pl.BlockSpec((1, 1, q_tile, hd), lambda bb, i, h, j: (bb, h, i, 0)),
            pl.BlockSpec((1, 1, kv_tile, hd), lambda bb, i, h, j: (bb, h, j, 0)),
            pl.BlockSpec((1, 1, kv_tile, hd), lambda bb, i, h, j: (bb, h, j, 0)),
            pl.BlockSpec((1, hd, D), lambda bb, i, h, j: (h, 0, 0)),
            pl.BlockSpec((1, D), lambda bb, i, h, j: (0, 0)),
            pl.BlockSpec((1, q_tile, D), lambda bb, i, h, j: (bb, i, 0)),
        ],
        out_specs=pl.BlockSpec((1, q_tile, D), lambda bb, i, h, j: (bb, i, 0)),
        scratch_shapes=[
            pltpu.VMEM((q_tile, 1), jnp.float32),    # running max
            pltpu.VMEM((q_tile, 1), jnp.float32),    # running sum
            pltpu.VMEM((q_tile, hd), jnp.float32),   # per-head accumulator
            pltpu.VMEM((q_tile, D), jnp.float32),    # out-projection accumulator
        ],
        compiler_params=_compiler_params(
            ("parallel", "parallel", "arbitrary", "arbitrary")),
    )(q, k, v, lp["wo"], lp["bo"], x)


# ----------------------- MLP (+ optional fused final LN) --------------------

def _mlp_kernel(*refs, eps, fuse_final_ln):
    if fuse_final_ln:
        (x_ref, g_ref, b_ref, w1_ref, b1_ref, w2_ref, b2_ref,
         fg_ref, fb_ref, o_ref, acc_sc) = refs
    else:
        (x_ref, g_ref, b_ref, w1_ref, b1_ref, w2_ref, b2_ref,
         o_ref, acc_sc) = refs
        fg_ref = fb_ref = None

    t = pl.program_id(2)
    n_t = pl.num_programs(2)

    @pl.when(t == 0)
    def _():
        acc_sc[...] = jnp.zeros_like(acc_sc)

    x = x_ref[0]                                              # (tn, D) fp32
    hn = _layernorm(x, g_ref[...], b_ref[...], eps).astype(jnp.bfloat16)
    h = jnp.dot(hn, w1_ref[...], preferred_element_type=jnp.float32) + b1_ref[...]
    h = jax.nn.gelu(h, approximate=True).astype(jnp.bfloat16)  # gelu_pytorch_tanh
    acc_sc[...] += jnp.dot(h, w2_ref[...], preferred_element_type=jnp.float32)

    @pl.when(t == n_t - 1)
    def _():
        y = x + acc_sc[...] + b2_ref[...]
        if fuse_final_ln:
            y = _layernorm(y, fg_ref[...], fb_ref[...], eps)
        o_ref[0] = y


def mlp_block(x, lp, eps, *, row_tile, inter_tile, final_ln=None):
    B, N, D = x.shape
    inter = lp["w1"].shape[1]
    nt = N // row_tile
    ni = inter // inter_tile
    fuse = final_ln is not None
    kernel = functools.partial(_mlp_kernel, eps=eps, fuse_final_ln=fuse)
    in_specs = [
        pl.BlockSpec((1, row_tile, D), lambda bb, i, t: (bb, i, 0)),
        pl.BlockSpec((1, D), lambda bb, i, t: (0, 0)),
        pl.BlockSpec((1, D), lambda bb, i, t: (0, 0)),
        pl.BlockSpec((D, inter_tile), lambda bb, i, t: (0, t)),
        pl.BlockSpec((1, inter_tile), lambda bb, i, t: (0, t)),
        pl.BlockSpec((inter_tile, D), lambda bb, i, t: (t, 0)),
        pl.BlockSpec((1, D), lambda bb, i, t: (0, 0)),
    ]
    args = [x, lp["ln2_g"], lp["ln2_b"], lp["w1"], lp["b1"], lp["w2"], lp["b2"]]
    if fuse:
        in_specs += [pl.BlockSpec((1, D), lambda bb, i, t: (0, 0)),
                     pl.BlockSpec((1, D), lambda bb, i, t: (0, 0))]
        args += [final_ln[0], final_ln[1]]
    return pl.pallas_call(
        kernel,
        out_shape=jax.ShapeDtypeStruct((B, N, D), jnp.float32),
        grid=(B, nt, ni),
        in_specs=in_specs,
        out_specs=pl.BlockSpec((1, row_tile, D), lambda bb, i, t: (bb, i, 0)),
        scratch_shapes=[pltpu.VMEM((row_tile, D), jnp.float32)],
        compiler_params=_compiler_params(("parallel", "parallel", "arbitrary")),
    )(*args)


# ------------------------------- model glue ---------------------------------

def extract_patches(pixel_values, P):
    """NCHW -> [B, Num_Patches, C*P*P] (same ordering as Conv2d im2col)."""
    B, C, H, W = pixel_values.shape
    x = pixel_values.reshape(B, C, H // P, P, W // P, P)
    x = x.transpose(0, 2, 4, 1, 3, 5)                  # B, H/P, W/P, C, P, P
    return x.reshape(B, (H // P) * (W // P), C * P * P)


def vision_model_forward(pixel_values, params, cfg):
    eps = cfg["layer_norm_eps"]
    patches = extract_patches(pixel_values, cfg["patch_size"]).astype(jnp.bfloat16)
    N = patches.shape[1]
    row_tile = 8 if N % 8 == 0 else N                  # sequence-row tile
    inter = params["layers"][0]["w1"].shape[1]
    inter_tile = 512 if inter % 512 == 0 else inter    # intermediate-dim tile

    x = patch_embed(patches, params["patch_w"], params["patch_b"], params["pos"])
    n_layers = len(params["layers"])
    for li, lp in enumerate(params["layers"]):
        q, k, v = qkv_project(x, lp, eps, row_tile=row_tile)
        x = attention_block(q, k, v, x, lp, q_tile=row_tile, kv_tile=row_tile)
        final_ln = ((params["post_ln_g"], params["post_ln_b"])
                    if li == n_layers - 1 else None)
        x = mlp_block(x, lp, eps, row_tile=row_tile, inter_tile=inter_tile,
                      final_ln=final_ln)
    return x


# pure-JAX reference (fp32 math on the same bf16 weights) for a sanity check
def reference_forward(pixel_values, params, cfg):
    eps = cfg["layer_norm_eps"]
    f32 = jnp.float32
    patches = extract_patches(pixel_values, cfg["patch_size"])
    patches = patches.astype(jnp.bfloat16).astype(f32)   # same input rounding
    x = patches @ params["patch_w"].astype(f32) + params["patch_b"] + params["pos"]
    for lp in params["layers"]:
        h = _layernorm(x, lp["ln1_g"], lp["ln1_b"], eps)
        q = jnp.einsum("bnd,hde->bhne", h, lp["wq"].astype(f32)) + lp["bq"]
        k = jnp.einsum("bnd,hde->bhne", h, lp["wk"].astype(f32)) + lp["bk"]
        v = jnp.einsum("bnd,hde->bhne", h, lp["wv"].astype(f32)) + lp["bv"]
        hd = q.shape[-1]
        s = jnp.einsum("bhqe,bhke->bhqk", q, k) * (hd ** -0.5)
        p = jax.nn.softmax(s, axis=-1)
        a = jnp.einsum("bhqk,bhke->bhqe", p, v)
        x = x + jnp.einsum("bhqe,hed->bqd", a, lp["wo"].astype(f32)) + lp["bo"]
        h = _layernorm(x, lp["ln2_g"], lp["ln2_b"], eps)
        h = jax.nn.gelu(h @ lp["w1"].astype(f32) + lp["b1"], approximate=True)
        x = x + h @ lp["w2"].astype(f32) + lp["b2"]
    return _layernorm(x, params["post_ln_g"], params["post_ln_b"], eps)


# ------------------------------- param init ---------------------------------

def init_params(key, cfg):
    D, inter = cfg["hidden_size"], cfg["intermediate_size"]
    C, P = cfg["num_channels"], cfg["patch_size"]
    H = cfg["num_attention_heads"]
    hd = D // H
    Np = (cfg["image_size"] // P) ** 2
    L = cfg["num_hidden_layers"]

    def dense(k, fan_in, shape):
        # matmul weights stored bf16 (MXU-native); biases / LN params fp32
        return (jax.random.normal(k, shape, jnp.float32) * fan_in ** -0.5
                ).astype(jnp.bfloat16)

    keys = iter(jax.random.split(key, 2 + 10 * L))
    params = {
        # PyTorch Conv2d / nn.Linear weights pre-transposed to [in, out]
        "patch_w": dense(next(keys), C * P * P, (C * P * P, D)),
        "patch_b": jnp.zeros((1, D), jnp.float32),
        "pos": 0.02 * jax.random.normal(next(keys), (Np, D), jnp.float32),
        "post_ln_g": jnp.ones((1, D), jnp.float32),
        "post_ln_b": jnp.zeros((1, D), jnp.float32),
        "layers": [],
    }
    for _ in range(L):
        # attention weights pre-split per head: [D, D] -> (H, D, hd) / (H, hd, D)
        wq = dense(next(keys), D, (D, D)).reshape(D, H, hd).transpose(1, 0, 2)
        wk = dense(next(keys), D, (D, D)).reshape(D, H, hd).transpose(1, 0, 2)
        wv = dense(next(keys), D, (D, D)).reshape(D, H, hd).transpose(1, 0, 2)
        wo = dense(next(keys), D, (D, D)).reshape(H, hd, D)
        lp = {
            "ln1_g": jnp.ones((1, D), jnp.float32),
            "ln1_b": jnp.zeros((1, D), jnp.float32),
            "wq": wq,
            "bq": 0.01 * jax.random.normal(next(keys), (H, 1, hd), jnp.float32),
            "wk": wk,
            "bk": jnp.zeros((H, 1, hd), jnp.float32),
            "wv": wv,
            "bv": 0.01 * jax.random.normal(next(keys), (H, 1, hd), jnp.float32),
            "wo": wo,
            "bo": jnp.zeros((1, D), jnp.float32),
            "ln2_g": jnp.ones((1, D), jnp.float32),
            "ln2_b": jnp.zeros((1, D), jnp.float32),
            "w1": dense(next(keys), D, (D, inter)),
            "b1": 0.01 * jax.random.normal(next(keys), (1, inter), jnp.float32),
            "w2": dense(next(keys), inter, (inter, D)),
            "b2": 0.01 * jax.random.normal(next(keys), (1, D), jnp.float32),
        }
        params["layers"].append(lp)
    return params


# ---------------------------------- main -------------------------------------

if __name__ == "__main__":
    cfg = dict(
        hidden_size=32,
        intermediate_size=64,
        num_hidden_layers=2,
        num_attention_heads=2,
        num_channels=3,
        image_size=32,
        patch_size=8,
        layer_norm_eps=1e-6,
        attention_dropout=0.0,   # eval-mode dropout is a no-op
    )
    key = jax.random.PRNGKey(0)
    k_param, k_x = jax.random.split(key)
    params = init_params(k_param, cfg)

    B = 2
    pixel_values = jax.random.normal(
        k_x, (B, cfg["num_channels"], cfg["image_size"], cfg["image_size"]),
        jnp.float32)

    out = jax.block_until_ready(vision_model_forward(pixel_values, params, cfg))
    ref = reference_forward(pixel_values, params, cfg)

    Np = (cfg["image_size"] // cfg["patch_size"]) ** 2
    assert out.shape == (B, Np, cfg["hidden_size"]), out.shape
    assert bool(jnp.all(jnp.isfinite(out)))
    # bf16 matmul operands vs fp32 reference math -> bf16-level tolerance
    max_err = float(jnp.max(jnp.abs(out - ref)))
    assert jnp.allclose(out, ref, rtol=3e-2, atol=3e-2), max_err
    print("KERNEL_OK")
</pallas_src>

<mosaic_0001>
module attributes {stable_mosaic.version = 11 : i64} {
  func.func @_patch_embed_kernel(%arg0: i32, %arg1: memref<1x16x192xbf16, #tpu.memory_space<vmem>>, %arg2: memref<192x32xbf16, #tpu.memory_space<vmem>>, %arg3: memref<1x32xf32, #tpu.memory_space<vmem>>, %arg4: memref<16x32xf32, #tpu.memory_space<vmem>>, %arg5: memref<1x16x32xf32, #tpu.memory_space<vmem>>) attributes {dimension_semantics = [#tpu.dimension_semantics<parallel>], iteration_bounds = array<i64: 2>, scalar_prefetch = 0 : i64, scratch_operands = 0 : i64, tpu.core_type = #tpu.core_type<tc>, window_params = [{transform_indices = @transform_0, window_bounds = array<i64: 1, 16, 192>}, {pipeline_mode = #tpu.pipeline_mode<synchronous>, transform_indices = @transform_1, window_bounds = array<i64: 192, 32>}, {pipeline_mode = #tpu.pipeline_mode<synchronous>, transform_indices = @transform_2, window_bounds = array<i64: 1, 32>}, {pipeline_mode = #tpu.pipeline_mode<synchronous>, transform_indices = @transform_3, window_bounds = array<i64: 16, 32>}, {transform_indices = @transform_4, window_bounds = array<i64: 1, 16, 32>}]} {
    %c0 = arith.constant 0 : index
    %c0_0 = arith.constant 0 : index
    %c0_1 = arith.constant 0 : index
    %0 = vector.load %arg1[%c0, %c0_0, %c0_1] : memref<1x16x192xbf16, #tpu.memory_space<vmem>>, vector<1x16x192xbf16>
    %1 = vector.shape_cast %0 : vector<1x16x192xbf16> to vector<16x192xbf16>
    %c0_2 = arith.constant 0 : index
    %c0_3 = arith.constant 0 : index
    %2 = vector.load %arg2[%c0_2, %c0_3] : memref<192x32xbf16, #tpu.memory_space<vmem>>, vector<192x32xbf16>
    %cst = arith.constant dense<0.000000e+00> : vector<16x32xf32>
    %3 = tpu.matmul %1, %2, %cst {dimension_numbers = #tpu.dot_dimension_numbers<[1], [0], [0], [1], [0, 0, 1, 1], [], []>} : vector<16x192xbf16>, vector<192x32xbf16>, vector<16x32xf32> -> vector<16x32xf32>
    %c0_4 = arith.constant 0 : index
    %c0_5 = arith.constant 0 : index
    %4 = vector.load %arg3[%c0_4, %c0_5] : memref<1x32xf32, #tpu.memory_space<vmem>>, vector<1x32xf32>
    %5 = vector.broadcast %4 : vector<1x32xf32> to vector<16x32xf32>
    %6 = arith.addf %3, %5 : vector<16x32xf32>
    %c0_6 = arith.constant 0 : index
    %c0_7 = arith.constant 0 : index
    %7 = vector.load %arg4[%c0_6, %c0_7] : memref<16x32xf32, #tpu.memory_space<vmem>>, vector<16x32xf32>
    %8 = arith.addf %6, %7 : vector<16x32xf32>
    %c0_8 = arith.constant 0 : index
    %c0_9 = arith.constant 0 : index
    %c0_10 = arith.constant 0 : index
    %9 = vector.load %arg5[%c0_8, %c0_9, %c0_10] : memref<1x16x32xf32, #tpu.memory_space<vmem>>, vector<1x16x32xf32>
    %10 = vector.shape_cast %9 : vector<1x16x32xf32> to vector<16x32xf32>
    %11 = vector.shape_cast %8 : vector<16x32xf32> to vector<1x16x32xf32>
    tpu.vector_store %arg5[%c0_8, %c0_9, %c0_10], %11 {strides = array<i32>} : memref<1x16x32xf32, #tpu.memory_space<vmem>>, vector<1x16x32xf32>,
    return
  }
  func.func @transform_0(%arg0: i32) -> (i32, i32, i32) {
    %c0_i32 = arith.constant 0 : i32
    %c0_i32_0 = arith.constant 0 : i32
    %c0_i32_1 = arith.constant 0 : i32
    return %arg0, %c0_i32, %c0_i32_0 : i32, i32, i32
  }
  func.func @transform_1(%arg0: i32) -> (i32, i32) {
    %c0_i32 = arith.constant 0 : i32
    %c0_i32_0 = arith.constant 0 : i32
    %c0_i32_1 = arith.constant 0 : i32
    return %c0_i32, %c0_i32_0 : i32, i32
  }
  func.func @transform_2(%arg0: i32) -> (i32, i32) {
    %c0_i32 = arith.constant 0 : i32
    %c0_i32_0 = arith.constant 0 : i32
    %c0_i32_1 = arith.constant 0 : i32
    return %c0_i32, %c0_i32_0 : i32, i32
  }
  func.func @transform_3(%arg0: i32) -> (i32, i32) {
    %c0_i32 = arith.constant 0 : i32
    %c0_i32_0 = arith.constant 0 : i32
    %c0_i32_1 = arith.constant 0 : i32
    return %c0_i32, %c0_i32_0 : i32, i32
  }
  func.func @transform_4(%arg0: i32) -> (i32, i32, i32) {
    %c0_i32 = arith.constant 0 : i32
    %c0_i32_0 = arith.constant 0 : i32
    %c0_i32_1 = arith.constant 0 : i32
    return %arg0, %c0_i32, %c0_i32_0 : i32, i32, i32
  }
}

</mosaic_0001>

<llo_original>
// kernel: tpu_custom_call.1
$region0: #{tpu_custom_call.1}
  #allocation0 [shape = 'u32[]', space=smem, size = 0x4, offset = 0x4, fixed_abs, tag = 'smem constant byte address 0x4 - core index']
  #allocation1 [shape = 'u32[72,128]{1,0:T(1,128)}', space=vmem, size = 0x9000, scoped, tag = 'internal scratch']
  %s0 = inlined_call_operand.vmem [shape: bf16[2,16,192], index: 0, kind: input, shape index: {}]
  %s1 = inlined_call_operand.vmem [shape: bf16[192,32], index: 1, kind: input, shape index: {}]
  %s2 = inlined_call_operand.vmem [shape: f32[1,32], index: 2, kind: input, shape index: {}]
  %s3 = inlined_call_operand.vmem [shape: f32[16,32], index: 3, kind: input, shape index: {}]
  %s4 = inlined_call_operand.hbm [shape: f32[2,16,32], index: 4, kind: output, shape index: {}]
  %s5 = sld [smem:[#allocation0]]
  $region49: #{tpu_custom_call.1} parent=0
    _
  %s7 = ssub.s32 1, %s5
  %s8 = scalar_select 0, %s7, %s5
  $region1: #{tpu_custom_call.1} parent=0
    #allocation2 [shape = 'u8[16384]{0}', space=vmem, size = 0x4000, scoped, tag = 'output window, operand 0']
    #allocation3 [shape = 's32[2]{0}', space=sflag, size = 0x8, scoped, tag = 'scoped memory for tpu_custom_call.1']
    %9 = vsyncpa [#allocation3], 0
    %s10 = scalar_lea.sflag [#allocation3], 1
    %11 = vsyncpa %s10, 0
    loop: start=0, step=1, limit=4
    $region2: #{tpu_custom_call.1} parent=1 // loop_pre_header
      _
    $region3: #{tpu_custom_call.1} parent=1 // loop_header
      %s13 = sphi 0, %s17
      %p14 = scmp.ge.s32.totalorder %s13, 4
      %s23 = sphi 0, %s25
      %s26 = sphi 0, %s23
      %s27 = sphi 0, %s26
      %s43 = sphi 0, %s27
      %s47 = sphi 0, %s47
      %s49 = sphi 0, %s47
      %s50 = sphi 0, %s49
      %s64 = sphi 0, %s50
      %s68 = sphi 0, %s68
      %s70 = sphi 0, %s68
      %s71 = sphi 0, %s70
      %s85 = sphi 0, %s71
      %s89 = sphi 0, %s89
      %s91 = sphi 0, %s89
      %s92 = sphi 0, %s91
      %s106 = sphi 0, %s92
      %s112 = sphi 0, %s114
      %s115 = sphi 0, %s112
      %s116 = sphi 0, %s115
      %s132 = sphi 0, %s116
    $region4: #{tpu_custom_call.1} parent=1 // loop_header_branch
      %16 = sbr.rel (%p14) target = $region8
    $region5: #{tpu_custom_call.1} parent=1 // loop_body
      %s18 = ssub.s32 %s13, 1
      %s19 = ssub.s32 %s13, 2
      %s20 = sadd.s32 %s13, 1
      %s21 = ssub.s32 %s13, %s20
      %p22 = scmp.eq.s32.totalorder %s21, 0
      %s24 = sadd.s32 %s23, 1
      %s25 = scalar_select %p22, %s23, %s24
      %p28 = pneg %p22
      %p29 = scmp.eq.s32.totalorder %s13, 1
      %p30 = por %p28, %p29
      %p31 = scmp.ne.s32.totalorder %s23, %s26
      %p32 = scmp.eq.s32.totalorder %s13, 0
      %p33 = por %p31, %p32
      %p34 = scmp.ne.s32.totalorder %s23, %s26
      %p35 = scmp.eq.s32.totalorder %s18, 1
      %p36 = por %p34, %p35
      %p37 = scmp.ne.s32.totalorder %s26, %s27
      %p38 = scmp.eq.s32.totalorder %s18, 0
      %p39 = por %p37, %p38
      %p40 = scmp.ne.s32.totalorder %s26, %s27
      %p41 = scmp.eq.s32.totalorder %s19, 1
      %p42 = por %p40, %p41
      %p44 = scmp.ne.s32.totalorder %s27, %s43
      %p45 = scmp.eq.s32.totalorder %s19, 0
      %p46 = por %p44, %p45
      %s48 = sadd.s32 %s47, 1
      %p51 = scmp.eq.s32.totalorder %s13, 1
      %p52 = scmp.ne.s32.totalorder %s47, %s49
      %p53 = scmp.eq.s32.totalorder %s13, 0
      %p54 = por %p52, %p53
      %p55 = scmp.ne.s32.totalorder %s47, %s49
      %p56 = scmp.eq.s32.totalorder %s18, 1
      %p57 = por %p55, %p56
      %p58 = scmp.ne.s32.totalorder %s49, %s50
      %p59 = scmp.eq.s32.totalorder %s18, 0
      %p60 = por %p58, %p59
      %p61 = scmp.ne.s32.totalorder %s49, %s50
      %p62 = scmp.eq.s32.totalorder %s19, 1
      %p63 = por %p61, %p62
      %p65 = scmp.ne.s32.totalorder %s50, %s64
      %p66 = scmp.eq.s32.totalorder %s19, 0
      %p67 = por %p65, %p66
      %s69 = sadd.s32 %s68, 1
      %p72 = scmp.eq.s32.totalorder %s13, 1
      %p73 = scmp.ne.s32.totalorder %s68, %s70
      %p74 = scmp.eq.s32.totalorder %s13, 0
      %p75 = por %p73, %p74
      %p76 = scmp.ne.s32.totalorder %s68, %s70
      %p77 = scmp.eq.s32.totalorder %s18, 1
      %p78 = por %p76, %p77
      %p79 = scmp.ne.s32.totalorder %s70, %s71
      %p80 = scmp.eq.s32.totalorder %s18, 0
      %p81 = por %p79, %p80
      %p82 = scmp.ne.s32.totalorder %s70, %s71
      %p83 = scmp.eq.s32.totalorder %s19, 1
      %p84 = por %p82, %p83
      %p86 = scmp.ne.s32.totalorder %s71, %s85
      %p87 = scmp.eq.s32.totalorder %s19, 0
      %p88 = por %p86, %p87
      %s90 = sadd.s32 %s89, 1
      %p93 = scmp.eq.s32.totalorder %s13, 1
      %p94 = scmp.ne.s32.totalorder %s89, %s91
      %p95 = scmp.eq.s32.totalorder %s13, 0
      %p96 = por %p94, %p95
      %p97 = scmp.ne.s32.totalorder %s89, %s91
      %p98 = scmp.eq.s32.totalorder %s18, 1
      %p99 = por %p97, %p98
      %p100 = scmp.ne.s32.totalorder %s91, %s92
      %p101 = scmp.eq.s32.totalorder %s18, 0
      %p102 = por %p100, %p101
      %p103 = scmp.ne.s32.totalorder %s91, %s92
      %p104 = scmp.eq.s32.totalorder %s19, 1
      %p105 = por %p103, %p104
      %p107 = scmp.ne.s32.totalorder %s92, %s106
      %p108 = scmp.eq.s32.totalorder %s19, 0
      %p109 = por %p107, %p108
      %s110 = ssub.s32 %s13, %s20
      %p111 = scmp.eq.s32.totalorder %s110, 0
      %s113 = sadd.s32 %s112, 1
      %s114 = scalar_select %p111, %s112, %s113
      %p117 = pneg %p111
      %p118 = scmp.eq.s32.totalorder %s13, 1
      %p119 = por %p117, %p118
      %p120 = scmp.ne.s32.totalorder %s112, %s115
      %p121 = scmp.eq.s32.totalorder %s13, 0
      %p122 = por %p120, %p121
      %p123 = scmp.ne.s32.totalorder %s112, %s115
      %p124 = scmp.eq.s32.totalorder %s18, 1
      %p125 = por %p123, %p124
      %p126 = scmp.ne.s32.totalorder %s115, %s116
      %p127 = scmp.eq.s32.totalorder %s18, 0
      %p128 = por %p126, %p127
      %p129 = scmp.ne.s32.totalorder %s115, %s116
      %p130 = scmp.eq.s32.totalorder %s19, 1
      %p131 = por %p129, %p130
      %p133 = scmp.ne.s32.totalorder %s116, %s132
      %p134 = scmp.eq.s32.totalorder %s19, 0
      %p135 = por %p133, %p134
      %p136 = scmp.le.s32.totalorder 1, %s13
      %p137 = scmp.lt.s32.totalorder %s13, 3
      %p138 = pnand %p136, %p137
      %p139 = pneg %p138
      // Predicated region
      $region9: #{tpu_custom_call.1} parent=5 // pred_check
        _
      $region10: #{tpu_custom_call.1} parent=5 // pred_check_branch
        %141 = sbr.rel (%p138) target = $region12
      $region11: #{tpu_custom_call.1} parent=5 // pred_region
        %s142 = ssub.s32 %s13, 1
        // Predicated region
        $region13: #{tpu_custom_call.1} parent=11 // pred_check
          %p143 = pneg %p60
        $region14: #{tpu_custom_call.1} parent=11 // pred_check_branch
          %145 = sbr.rel (%p143) target = $region16
        $region15: #{tpu_custom_call.1} parent=11 // pred_region
          _
        $region16: #{tpu_custom_call.1} parent=11 // pred_fallthru
          _
        // Predicated region
        $region17: #{tpu_custom_call.1} parent=11 // pred_check
          %p146 = pneg %p81
        $region18: #{tpu_custom_call.1} parent=11 // pred_check_branch
          %148 = sbr.rel (%p146) target = $region20
        $region19: #{tpu_custom_call.1} parent=11 // pred_region
          _
        $region20: #{tpu_custom_call.1} parent=11 // pred_fallthru
          _
        // Predicated region
        $region21: #{tpu_custom_call.1} parent=11 // pred_check
          %p149 = pneg %p102
        $region22: #{tpu_custom_call.1} parent=11 // pred_check_branch
          %151 = sbr.rel (%p149) target = $region24
        $region23: #{tpu_custom_call.1} parent=11 // pred_region
          _
        $region24: #{tpu_custom_call.1} parent=11 // pred_fallthru
          _
      $region12: #{tpu_custom_call.1} parent=5 // pred_fallthru
        _
      %p152 = scmp.lt.s32.totalorder %s13, 2
      // Predicated region
      $region25: #{tpu_custom_call.1} parent=5 // pred_check
        %p153 = pneg %p152
      $region26: #{tpu_custom_call.1} parent=5 // pred_check_branch
        %155 = sbr.rel (%p153) target = $region28
      $region27: #{tpu_custom_call.1} parent=5 // pred_region
        // Predicated region
        $region29: #{tpu_custom_call.1} parent=27 // pred_check
          %p156 = pneg %p33
        $region30: #{tpu_custom_call.1} parent=27 // pred_check_branch
          %158 = sbr.rel (%p156) target = $region32
        $region31: #{tpu_custom_call.1} parent=27 // pred_region
          %p159 = scmp.lt.s32.totalorder %s13, 1
          %s160 = scalar_select %p159, %s13, 1
          %s161 = smul.addr %s160, 4
          %s162 = smul.addr %s161, 4
          %s163 = scalar_lea.vmem %s0, %s162
        $region32: #{tpu_custom_call.1} parent=27 // pred_fallthru
          _
      $region28: #{tpu_custom_call.1} parent=5 // pred_fallthru
        _
      %p164 = scmp.le.s32.totalorder 1, %s13
      %p165 = scmp.lt.s32.totalorder %s13, 3
      %p166 = pnand %p164, %p165
      %p167 = pneg %p166
      // Predicated region
      $region33: #{tpu_custom_call.1} parent=5 // pred_check
        _
      $region34: #{tpu_custom_call.1} parent=5 // pred_check_branch
        %169 = sbr.rel (%p166) target = $region36
      $region35: #{tpu_custom_call.1} parent=5 // pred_region
        %s170 = ssub.s32 %s13, 1
        %p171 = scmp.lt.s32.totalorder %s18, 1
        %s172 = scalar_select %p171, %s18, 1
        %s173 = smul.addr %s172, 4
        %s174 = smul.addr %s173, 4
        %s175 = scalar_lea.vmem %s0, %s174
        %p176 = pneg %p39
        %p177 = pneg %p36
        %p178 = pneg %p60
        %p179 = pneg %p57
        %p180 = pneg %p81
        %p181 = pneg %p78
        %p182 = pneg %p102
        %p183 = pneg %p99
        %p184 = pneg %p128
        %p185 = pneg %p125
        %s186 = sand.u32 %s115, 1
        %s187 = scalar_lea.sflag [#allocation3], %s186
        %s188 = sand.u32 %s115, 1
        %s189 = smul.addr %s188, 16
        %s190 = scalar_lea.vmem [#allocation2], %s189
        %p191 = scmp.lt.s32.totalorder %s18, 1
        %s192 = scalar_select %p191, %s18, 1
        %s193 = smul.addr %s192, 4
        %s194 = smul.addr %s193, 4
        %s195 = scalar_lea.vmem %s0, %s194
        %v197 = vld [vmem:[%s195] sm:$0xff]
        %v198 = vld [vmem:[%s195 + $0x8] sm:$0xff]
        %v199 = vld [vmem:[%s1] sm:$0xf]
        %v200 = vld [vmem:[%s1 + $0x4] sm:$0xf]
        %v201 = vld [vmem:[%s1 + $0x8] sm:$0xf]
        %v202 = vld [vmem:[%s1 + $0xc] sm:$0xf]
        %v203 = vld [vmem:[%s1 + $0x10] sm:$0xf]
        %v204 = vld [vmem:[%s1 + $0x14] sm:$0xf]
        %v205 = vld [vmem:[%s1 + $0x18] sm:$0xf]
        %v206 = vld [vmem:[%s1 + $0x1c] sm:$0xf]
        %v207 = vld [vmem:[%s1 + $0x20] sm:$0xf]
        %v208 = vld [vmem:[%s1 + $0x24] sm:$0xf]
        %v209 = vld [vmem:[%s1 + $0x28] sm:$0xf]
        %v210 = vld [vmem:[%s1 + $0x2c] sm:$0xf]
        %v211 = vld [vmem:[%s1 + $0x30] sm:$0xf]
        %v212 = vld [vmem:[%s1 + $0x34] sm:$0xf]
        %v213 = vld [vmem:[%s1 + $0x38] sm:$0xf]
        %v214 = vld [vmem:[%s1 + $0x3c] sm:$0xf]
        %v215 = vld [vmem:[%s1 + $0x40] sm:$0xf]
        %v216 = vld [vmem:[%s1 + $0x44] sm:$0xf]
        %v217 = vld [vmem:[%s1 + $0x48] sm:$0xf]
        %v218 = vld [vmem:[%s1 + $0x4c] sm:$0xf]
        %v219 = vld [vmem:[%s1 + $0x50] sm:$0xf]
        %v220 = vld [vmem:[%s1 + $0x54] sm:$0xf]
        %v221 = vld [vmem:[%s1 + $0x58] sm:$0xf]
        %v222 = vld [vmem:[%s1 + $0x5c] sm:$0xf]
        %v223 = vld [vmem:[%s2] sm:$0x1]
        %v225 = vperm.slane %v223, 0
        %v229 = vunpack.c.l.b16 %v197
        %v230 = vunpack.c.h.b16 %v197
        %v231 = vunpack.c.l.b16 %v198
        %v232 = vunpack.c.h.b16 %v198
        %v233 = vpack.c.b16 %v231, %v229
        %v234 = vpack.c.b16 %v232, %v230
        %v260 = vunpack.c.l.b16 %v199
        %v261 = vunpack.c.l.b16 %v200
        %v262 = vunpack.c.l.b16 %v201
        %v263 = vunpack.c.l.b16 %v202
        %v264 = vunpack.c.l.b16 %v203
        %v265 = vunpack.c.l.b16 %v204
        %v266 = vunpack.c.l.b16 %v205
        %v267 = vunpack.c.l.b16 %v206
        %v268 = vunpack.c.l.b16 %v207
        %v269 = vunpack.c.l.b16 %v208
        %v270 = vunpack.c.l.b16 %v209
        %v271 = vunpack.c.l.b16 %v210
        %v272 = vunpack.c.l.b16 %v211
        %v273 = vunpack.c.l.b16 %v212
        %v274 = vunpack.c.l.b16 %v213
        %v275 = vunpack.c.l.b16 %v214
        %v276 = vunpack.c.l.b16 %v215
        %v277 = vunpack.c.l.b16 %v216
        %v278 = vunpack.c.l.b16 %v217
        %v279 = vunpack.c.l.b16 %v218
        %v280 = vunpack.c.l.b16 %v219
        %v281 = vunpack.c.l.b16 %v220
        %v282 = vunpack.c.l.b16 %v221
        %v283 = vunpack.c.l.b16 %v222
        %v284 = vpack.c.b16 %v261, %v260
        %v285 = vpack.c.b16 %v263, %v262
        %v286 = vpack.c.b16 %v265, %v264
        %v287 = vpack.c.b16 %v267, %v266
        %v288 = vpack.c.b16 %v269, %v268
        %v289 = vpack.c.b16 %v271, %v270
        %v290 = vpack.c.b16 %v273, %v272
        %v291 = vpack.c.b16 %v275, %v274
        %v292 = vpack.c.b16 %v277, %v276
        %v293 = vpack.c.b16 %v279, %v278
        %v294 = vpack.c.b16 %v281, %v280
        %v295 = vpack.c.b16 %v283, %v282
        %vm308 = vcmask 523264
        %v310 = vsel %vm308, %v234, 0
        %312 = vmatpush.bf16.msra.mxu0 %v291
        %313 = vmatpush.bf16.msra.mxu0 %v290
        %314 = vmatpush.bf16.msra.mxu0 %v289
        %315 = vmatpush.bf16.msra.mxu0 %v288
        %316 = vmatpush.bf16.msra.mxu0 %v287
        %317 = vmatpush.bf16.msra.mxu0 %v286
        %318 = vmatpush.bf16.msra.mxu0 %v285
        %319 = vmatpush.bf16.msra.mxu0 %v284
        %320 = vmatmul.bf16.gmra.mxu0 %v233
        %v321 = vpop.f32.mrf.mxu0
        %v322 = vadd.f32 %v225, %v321
        %v323 = vpop.f32.mrf.mxu0
        %v324 = vadd.f32 %v225, %v323
        %325 = vdwg.mxu0
        %326 = vmatpush.bf16.msra.mxu0 0
        %327 = vmatpush.bf16.msra.mxu0 0
        %328 = vmatpush.bf16.msra.mxu0 0
        %329 = vmatpush.bf16.msra.mxu0 0
        %330 = vmatpush.bf16.msra.mxu0 %v295
        %331 = vmatpush.bf16.msra.mxu0 %v294
        %332 = vmatpush.bf16.msra.mxu0 %v293
        %333 = vmatpush.bf16.msra.mxu0 %v292
        %334 = vmatmul.bf16.gmra.mxu0 %v310
        %v335 = vpop.f32.mrf.mxu0
        %v336 = vadd.f32 %v322, %v335
        %v337 = vpop.f32.mrf.mxu0
        %v338 = vadd.f32 %v324, %v337
        %339 = vdwg.mxu0
        %v340 = vld [vmem:[%s3] sm:$0xff]
        %v341 = vld [vmem:[%s3 + $0x8] sm:$0xff]
        %v342 = vadd.f32 %v336, %v340
        %v343 = vadd.f32 %v338, %v341
        %vm344 = vcmask 261120
        %345 = vst.msk [vmem:[%s190] sm:$0xff] %vm344, %v342
        %346 = vst.msk [vmem:[%s190 + $0x8] sm:$0xff] %vm344, %v343
        %s347 = sand.u32 %s115, 1
        %s348 = scalar_lea.sflag [#allocation3], %s347
        %s349 = sand.u32 %s115, 1
        %s350 = smul.addr %s349, 16
        %s351 = scalar_lea.vmem [#allocation2], %s350
        // Predicated region
        $region37: #{tpu_custom_call.1} parent=35 // pred_check
          %p352 = pneg %p125
        $region38: #{tpu_custom_call.1} parent=35 // pred_check_branch
          %354 = sbr.rel (%p352) target = $region40
        $region39: #{tpu_custom_call.1} parent=35 // pred_region
          %356 = vsyncadd %s348, 0
          %s357 = smul.addr %s18, 2
          %s358 = smul.addr %s357, 8
          %s359 = scalar_lea.hbm %s4, %s358
          %s360 = sshll.u32 %s351, 4
          %s361 = int_to_ptr.vmem [resolvable:$true] %s360
          %s362 = sshll.u32 %s359, 4
          %s363 = int_to_ptr.hbm [resolvable:$true] %s362
          %368 = dma.vmem_to_hbm [thread:$0]  %s361, 256, %s363, %s348, 128, 128, 8
        $region40: #{tpu_custom_call.1} parent=35 // pred_fallthru
          _
      $region36: #{tpu_custom_call.1} parent=5 // pred_fallthru
        _
      %p369 = scmp.le.s32.totalorder 2, %s13
      // Predicated region
      $region41: #{tpu_custom_call.1} parent=5 // pred_check
        %p370 = pneg %p369
      $region42: #{tpu_custom_call.1} parent=5 // pred_check_branch
        %372 = sbr.rel (%p370) target = $region44
      $region43: #{tpu_custom_call.1} parent=5 // pred_region
        %s373 = ssub.s32 %s13, 2
        // Predicated region
        $region45: #{tpu_custom_call.1} parent=43 // pred_check
          %p374 = pneg %p131
        $region46: #{tpu_custom_call.1} parent=43 // pred_check_branch
          %376 = sbr.rel (%p374) target = $region48
        $region47: #{tpu_custom_call.1} parent=43 // pred_region
          %s377 = sand.u32 %s116, 1
          %s378 = scalar_lea.sflag [#allocation3], %s377
          %s379 = sand.u32 %s116, 1
          %s380 = smul.addr %s379, 16
          %s381 = scalar_lea.vmem [#allocation2], %s380
          %383 = dma.done %s378, 256
        $region48: #{tpu_custom_call.1} parent=43 // pred_fallthru
          _
      $region44: #{tpu_custom_call.1} parent=5 // pred_fallthru
        _
    $region6: #{tpu_custom_call.1} parent=1 // loop_footer
      %s17 = sadd.s32 1, %s13
    $region7: #{tpu_custom_call.1} parent=1 // loop_footer_branch
      %12 = sbr.rel target = $region3
    $region8: #{tpu_custom_call.1} parent=1 // loop_exit
      _
    %384 = vsyncpa [#allocation3], 1
    %s385 = scalar_lea.sflag [#allocation3], 1
    %386 = vsyncpa %s385, 1

</llo_original>
